<compile_context>
chip_gen: v6e
topology: v6e:2x2x1
jax: 0.10.0
libtpu: 0.0.40
codegen_flags: <defaults>
</compile_context>

<pallas_src>
import jax
import jax.numpy as jnp
from jax.experimental import pallas as pl
from jax.experimental.pallas import tpu as pltpu


def _round_up(x, m):
    return ((x + m - 1) // m) * m


def _mlp_kernel(x_ref, w1_ref, w2_ref, sb_ref, o_ref):
    x = x_ref[...]                                   # (TM, Fp) f32
    sb = sb_ref[...]                                 # (4, Fp)  f32: s1, b1', s2, b2'
    # layer 1: linear (bf16 MXU, f32 accum), BN scale/shift in f32, ReLU; dropout=id (eval)
    y = jnp.dot(x.astype(jnp.bfloat16), w1_ref[...],
                preferred_element_type=jnp.float32)
    y = jnp.maximum(y * sb[0:1, :] + sb[1:2, :], 0.0)
    # layer 2
    y = jnp.dot(y.astype(jnp.bfloat16), w2_ref[...],
                preferred_element_type=jnp.float32)
    y = jnp.maximum(y * sb[2:3, :] + sb[3:4, :], 0.0)
    # residual
    o_ref[...] = (x + y).astype(o_ref.dtype)


def prepare_kernel_params(params):
    """Pad features to a multiple of 128, cast weights to bf16 (MXU), and pack
    BN scale + (bias folded with BN shift) into a single (4, Fp) f32 array."""
    F = params["b1"].shape[0]
    Fp = _round_up(max(F, 128), 128)

    w1p = jnp.zeros((Fp, Fp), jnp.float32).at[:F, :F].set(params["w1_t"]).astype(jnp.bfloat16)
    w2p = jnp.zeros((Fp, Fp), jnp.float32).at[:F, :F].set(params["w2_t"]).astype(jnp.bfloat16)

    sb = jnp.zeros((4, Fp), jnp.float32)
    sb = sb.at[0, :F].set(params["s1"])
    sb = sb.at[1, :F].set(params["b1"] * params["s1"] + params["t1"])
    sb = sb.at[2, :F].set(params["s2"])
    sb = sb.at[3, :F].set(params["b2"] * params["s2"] + params["t2"])

    return {"w1": w1p, "w2": w2p, "sb": sb, "F": F, "Fp": Fp}


def _spec(block_shape, index_map, nbuf=None):
    """BlockSpec with optional explicit buffer count (falls back if unsupported)."""
    if nbuf is None:
        return pl.BlockSpec(block_shape, index_map)
    try:
        return pl.BlockSpec(block_shape, index_map, pipeline_mode=pl.Buffered(nbuf))
    except (AttributeError, TypeError):
        return pl.BlockSpec(block_shape, index_map)


def my_linear_simple(x, kparams, *, tm=None, out_dtype=None):
    """x: (N, F) float32.  kparams: output of prepare_kernel_params."""
    N, F = x.shape
    assert F == kparams["F"]
    Fp = kparams["Fp"]
    out_dtype = x.dtype if out_dtype is None else out_dtype
    out_isize = jnp.dtype(out_dtype).itemsize

    try:
        vmem_cap = pltpu.get_tpu_info().vmem_capacity_bytes
    except Exception:
        vmem_cap = 64 * 1024 * 1024       # v7x per-TensorCore size: safe on every chip
    budget = int(0.85 * vmem_cap)

    # Row tile: multiple of 16 (bf16 sublane tile), large enough to amortize the
    # per-grid-step overhead, small enough that the row grid gets >= 2 steps when
    # N allows it (so v7x megacore can split the "parallel" axis across 2 TCs).
    if tm is None:
        tm = min(512, _round_up(pl.cdiv(N, 2), 16))
    tm = _round_up(max(min(tm, _round_up(N, 16)), 16), 16)

    def n_in_bufs(tm_):
        # Deeper x buffering only where each grid step is tiny (DMA exposed).
        return 3 if (Fp <= 512 and pl.cdiv(N, tm_) > 2) else 2

    def footprint(tm_):
        return (2 * Fp * Fp * 2                    # two bf16 weight mats, single-buffered
                + 8 * Fp * 4                       # scale/bias (padded to 8 sublanes)
                + n_in_bufs(tm_) * tm_ * Fp * 4    # x tiles
                + 2 * tm_ * Fp * out_isize)        # out tiles, double-buffered

    while tm > 16 and footprint(tm) > budget:
        tm = _round_up(max(tm // 2, 16), 16)
    # TODO(synk): if the two weight matrices alone exceed the VMEM budget
    # (Fp > ~3.5k on 128 MiB parts, ~2.4k on v7x), the weights need their own
    # grid axis (tile W2's output columns, or tile K with an f32 accumulator and
    # pl.when init/finalize); not implemented here.

    # Only the feature axis ever needs a padded copy (lane-dense 128-wide stores /
    # full MXU lanes).  The row axis uses a cdiv grid: Pallas masks the edge block.
    xp = x if Fp == F else jnp.pad(x, ((0, 0), (0, Fp - F)))

    grid = (pl.cdiv(N, tm),)
    nbx = n_in_bufs(tm)
    x_spec = _spec((tm, Fp), lambda i: (i, 0), None if nbx == 2 else nbx)
    out_spec = pl.BlockSpec((tm, Fp), lambda i: (i, 0))
    w_spec = _spec((Fp, Fp), lambda i: (0, 0), 1)   # grid-invariant -> single buffer
    sb_spec = _spec((4, Fp), lambda i: (0, 0), 1)

    cost = pl.CostEstimate(
        flops=2 * 2 * N * Fp * Fp,                          # two matmuls
        transcendentals=0,
        bytes_accessed=(N * Fp * 4 + N * Fp * out_isize     # x in + out
                        + 2 * Fp * Fp * 2 + 4 * Fp * 4),    # bf16 weights + scale/bias
    )
    vmem_limit = int(min(budget, max(footprint(tm) + (4 << 20), 32 << 20)))

    out = pl.pallas_call(
        _mlp_kernel,
        out_shape=jax.ShapeDtypeStruct((N, Fp), out_dtype),
        grid_spec=pltpu.PrefetchScalarGridSpec(
            num_scalar_prefetch=0,
            grid=grid,
            in_specs=[x_spec, w_spec, w_spec, sb_spec],
            out_specs=out_spec,
        ),
        compiler_params=pltpu.CompilerParams(
            dimension_semantics=("parallel",),
            vmem_limit_bytes=vmem_limit,
        ),
        cost_estimate=cost,
    )(xp, kparams["w1"], kparams["w2"], kparams["sb"])

    return out if Fp == F else out[:, :F]


def init_params(key, linear_size, eps=1e-5):
    """Deterministic synthetic parameters matching nn.Linear / BatchNorm1d (eval).
    Linear weights are stored transposed (in, out) so the math is x @ w_t."""
    F = linear_size
    ks = jax.random.split(key, 10)
    bound = 1.0 / jnp.sqrt(F)

    w1 = jax.random.uniform(ks[0], (F, F), jnp.float32, -bound, bound)   # (out, in)
    b1 = jax.random.uniform(ks[1], (F,),   jnp.float32, -bound, bound)
    w2 = jax.random.uniform(ks[2], (F, F), jnp.float32, -bound, bound)
    b2 = jax.random.uniform(ks[3], (F,),   jnp.float32, -bound, bound)

    g1 = jax.random.uniform(ks[4], (F,), jnp.float32, 0.5, 1.5)
    be1 = jax.random.normal(ks[5], (F,), jnp.float32) * 0.1
    m1 = jax.random.normal(ks[6], (F,), jnp.float32) * 0.1
    v1 = jax.random.uniform(ks[7], (F,), jnp.float32, 0.5, 1.5)
    g2 = jax.random.uniform(ks[8], (F,), jnp.float32, 0.5, 1.5)
    be2 = jax.random.normal(ks[9], (F,), jnp.float32) * 0.1
    m2 = jnp.zeros((F,), jnp.float32)
    v2 = jnp.ones((F,), jnp.float32)

    s1 = g1 / jnp.sqrt(v1 + eps)
    t1 = be1 - m1 * s1
    s2 = g2 / jnp.sqrt(v2 + eps)
    t2 = be2 - m2 * s2

    return {
        "w1_t": w1.T, "b1": b1, "s1": s1, "t1": t1,
        "w2_t": w2.T, "b2": b2, "s2": s2, "t2": t2,
    }


def reference(x, p):
    """Pure f32 reference of the module in eval mode."""
    y = x @ p["w1_t"] + p["b1"]
    y = y * p["s1"] + p["t1"]
    y = jnp.maximum(y, 0.0)
    y = y @ p["w2_t"] + p["b2"]
    y = y * p["s2"] + p["t2"]
    y = jnp.maximum(y, 0.0)
    return x + y


if __name__ == "__main__":
    linear_size = 32   # F
    batch = 16         # N
    key = jax.random.PRNGKey(0)
    kx, kp = jax.random.split(key)

    x = jax.random.normal(kx, (batch, linear_size), jnp.float32)
    params = init_params(kp, linear_size)
    kernel_params = prepare_kernel_params(params)

    out = my_linear_simple(x, kernel_params)
    out = jax.block_until_ready(out)

    ref = reference(x, params)
    assert out.shape == (batch, linear_size)
    # Tolerance loosened because the kernel uses bf16 MXU operands (f32 accumulation).
    assert jnp.allclose(out, ref, atol=5e-2, rtol=5e-2), float(jnp.max(jnp.abs(out - ref)))
    print("KERNEL_OK")
</pallas_src>

<mosaic_0001>
module attributes {stable_mosaic.version = 11 : i64} {
  func.func @_mlp_kernel(%arg0: i32, %arg1: memref<16x128xf32, #tpu.memory_space<vmem>>, %arg2: memref<128x128xbf16, #tpu.memory_space<vmem>>, %arg3: memref<128x128xbf16, #tpu.memory_space<vmem>>, %arg4: memref<4x128xf32, #tpu.memory_space<vmem>>, %arg5: memref<16x128xf32, #tpu.memory_space<vmem>>) attributes {dimension_semantics = [#tpu.dimension_semantics<parallel>], iteration_bounds = array<i64: 1>, scalar_prefetch = 0 : i64, scratch_operands = 0 : i64, tpu.core_type = #tpu.core_type<tc>, window_params = [{transform_indices = @transform_0, window_bounds = array<i64: 16, 128>}, {pipeline_mode = #tpu.pipeline_mode<synchronous>, transform_indices = @transform_1, window_bounds = array<i64: 128, 128>}, {pipeline_mode = #tpu.pipeline_mode<synchronous>, transform_indices = @transform_2, window_bounds = array<i64: 128, 128>}, {pipeline_mode = #tpu.pipeline_mode<synchronous>, transform_indices = @transform_3, window_bounds = array<i64: 4, 128>}, {transform_indices = @transform_4, window_bounds = array<i64: 16, 128>}]} {
    %c0 = arith.constant 0 : index
    %c0_0 = arith.constant 0 : index
    %0 = vector.load %arg1[%c0, %c0_0] : memref<16x128xf32, #tpu.memory_space<vmem>>, vector<16x128xf32>
    %c0_1 = arith.constant 0 : index
    %c0_2 = arith.constant 0 : index
    %1 = vector.load %arg4[%c0_1, %c0_2] : memref<4x128xf32, #tpu.memory_space<vmem>>, vector<4x128xf32>
    %2 = arith.truncf %0 : vector<16x128xf32> to vector<16x128xbf16>
    %c0_3 = arith.constant 0 : index
    %c0_4 = arith.constant 0 : index
    %3 = vector.load %arg2[%c0_3, %c0_4] : memref<128x128xbf16, #tpu.memory_space<vmem>>, vector<128x128xbf16>
    %cst = arith.constant dense<0.000000e+00> : vector<16x128xf32>
    %4 = tpu.matmul %2, %3, %cst {dimension_numbers = #tpu.dot_dimension_numbers<[1], [0], [0], [1], [0, 0, 1, 1], [], []>} : vector<16x128xbf16>, vector<128x128xbf16>, vector<16x128xf32> -> vector<16x128xf32>
    %5 = vector.extract_strided_slice %1 {offsets = [0, 0], sizes = [1, 128], strides = [1, 1]} : vector<4x128xf32> to vector<1x128xf32>
    %6 = vector.broadcast %5 : vector<1x128xf32> to vector<16x128xf32>
    %7 = arith.mulf %4, %6 : vector<16x128xf32>
    %8 = vector.extract_strided_slice %1 {offsets = [1, 0], sizes = [1, 128], strides = [1, 1]} : vector<4x128xf32> to vector<1x128xf32>
    %9 = vector.broadcast %8 : vector<1x128xf32> to vector<16x128xf32>
    %10 = arith.addf %7, %9 : vector<16x128xf32>
    %cst_5 = arith.constant 0.000000e+00 : f32
    %11 = vector.broadcast %cst_5 : f32 to vector<16x128xf32>
    %12 = arith.maximumf %10, %11 : vector<16x128xf32>
    %13 = arith.truncf %12 : vector<16x128xf32> to vector<16x128xbf16>
    %c0_6 = arith.constant 0 : index
    %c0_7 = arith.constant 0 : index
    %14 = vector.load %arg3[%c0_6, %c0_7] : memref<128x128xbf16, #tpu.memory_space<vmem>>, vector<128x128xbf16>
    %cst_8 = arith.constant dense<0.000000e+00> : vector<16x128xf32>
    %15 = tpu.matmul %13, %14, %cst_8 {dimension_numbers = #tpu.dot_dimension_numbers<[1], [0], [0], [1], [0, 0, 1, 1], [], []>} : vector<16x128xbf16>, vector<128x128xbf16>, vector<16x128xf32> -> vector<16x128xf32>
    %16 = vector.extract_strided_slice %1 {offsets = [2, 0], sizes = [1, 128], strides = [1, 1]} : vector<4x128xf32> to vector<1x128xf32>
    %17 = vector.broadcast %16 : vector<1x128xf32> to vector<16x128xf32>
    %18 = arith.mulf %15, %17 : vector<16x128xf32>
    %19 = vector.extract_strided_slice %1 {offsets = [3, 0], sizes = [1, 128], strides = [1, 1]} : vector<4x128xf32> to vector<1x128xf32>
    %20 = vector.broadcast %19 : vector<1x128xf32> to vector<16x128xf32>
    %21 = arith.addf %18, %20 : vector<16x128xf32>
    %cst_9 = arith.constant 0.000000e+00 : f32
    %22 = vector.broadcast %cst_9 : f32 to vector<16x128xf32>
    %23 = arith.maximumf %21, %22 : vector<16x128xf32>
    %24 = arith.addf %0, %23 : vector<16x128xf32>
    %c0_10 = arith.constant 0 : index
    %c0_11 = arith.constant 0 : index
    %25 = vector.load %arg5[%c0_10, %c0_11] : memref<16x128xf32, #tpu.memory_space<vmem>>, vector<16x128xf32>
    tpu.vector_store %arg5[%c0_10, %c0_11], %24 {strides = array<i32>} : memref<16x128xf32, #tpu.memory_space<vmem>>, vector<16x128xf32>,
    return
  }
  func.func @transform_0(%arg0: i32) -> (i32, i32) {
    %c0_i32 = arith.constant 0 : i32
    %c0_i32_0 = arith.constant 0 : i32
    return %arg0, %c0_i32 : i32, i32
  }
  func.func @transform_1(%arg0: i32) -> (i32, i32) {
    %c0_i32 = arith.constant 0 : i32
    %c0_i32_0 = arith.constant 0 : i32
    %c0_i32_1 = arith.constant 0 : i32
    return %c0_i32, %c0_i32_0 : i32, i32
  }
  func.func @transform_2(%arg0: i32) -> (i32, i32) {
    %c0_i32 = arith.constant 0 : i32
    %c0_i32_0 = arith.constant 0 : i32
    %c0_i32_1 = arith.constant 0 : i32
    return %c0_i32, %c0_i32_0 : i32, i32
  }
  func.func @transform_3(%arg0: i32) -> (i32, i32) {
    %c0_i32 = arith.constant 0 : i32
    %c0_i32_0 = arith.constant 0 : i32
    %c0_i32_1 = arith.constant 0 : i32
    return %c0_i32, %c0_i32_0 : i32, i32
  }
  func.func @transform_4(%arg0: i32) -> (i32, i32) {
    %c0_i32 = arith.constant 0 : i32
    %c0_i32_0 = arith.constant 0 : i32
    return %arg0, %c0_i32 : i32, i32
  }
}

</mosaic_0001>

<llo_original>
// kernel: tpu_custom_call.1
$region0: #{tpu_custom_call.1}
  #allocation0 [shape = 'u32[]', space=smem, size = 0x4, offset = 0x4, fixed_abs, tag = 'smem constant byte address 0x4 - core index']
  #allocation1 [shape = 'u32[144,128]{1,0:T(1,128)}', space=vmem, size = 0x12000, scoped, tag = 'internal scratch']
  %s0 = inlined_call_operand.hbm [shape: f32[16,128], index: 0, kind: input, shape index: {}]
  %s1 = inlined_call_operand.hbm [shape: bf16[128,128], index: 1, kind: input, shape index: {}]
  %s2 = inlined_call_operand.hbm [shape: bf16[128,128], index: 2, kind: input, shape index: {}]
  %s3 = inlined_call_operand.vmem [shape: f32[4,128], index: 3, kind: input, shape index: {}]
  %s4 = inlined_call_operand.hbm [shape: f32[16,128], index: 4, kind: output, shape index: {}]
  %s5 = sld [smem:[#allocation0]]
  $region38: #{tpu_custom_call.1} parent=0
    _
  %s7 = ssub.s32 1, %s5
  %s8 = scalar_select 0, %s7, %s5
  $region1: #{tpu_custom_call.1} parent=0
    #allocation2 [shape = 'u8[8192]{0}', space=vmem, size = 0x2000, scoped, tag = 'input window, operand 0, single buffered']
    #allocation3 [shape = 's32[1]{0}', space=sflag, size = 0x4, scoped, tag = 'scoped memory for tpu_custom_call.1']
    #allocation4 [shape = 's32[1]{0}', space=sflag, size = 0x4, scoped, tag = 'scoped memory for tpu_custom_call.1']
    #allocation5 [shape = 'u8[32768]{0}', space=vmem, size = 0x8000, scoped, tag = 'input window, operand 1, single buffered']
    #allocation6 [shape = 's32[1]{0}', space=sflag, size = 0x4, scoped, tag = 'scoped memory for tpu_custom_call.1']
    #allocation7 [shape = 'u8[32768]{0}', space=vmem, size = 0x8000, scoped, tag = 'input window, operand 2, single buffered']
    #allocation8 [shape = 'u8[8192]{0}', space=vmem, size = 0x2000, scoped, tag = 'output window, operand 0, single buffered']
    %9 = vsyncpa [#allocation3], 0
    %10 = vsyncpa [#allocation6], 0
    %11 = vsyncpa [#allocation4], 0
    // Predicated region
    $region2: #{tpu_custom_call.1} parent=1 // pred_check
      _
    $region3: #{tpu_custom_call.1} parent=1 // pred_check_branch
      %13 = sbr.rel (0) target = $region5
    $region4: #{tpu_custom_call.1} parent=1 // pred_region
      %s15 = ssub.s32 256, 256
      %16 = vsyncadd [#allocation3], %s15
      %s17 = sshll.u32 [#allocation2], 4
      %s18 = int_to_ptr.vmem [resolvable:$true] %s17
      %23 = dma.hbm_to_vmem [thread:$0]  %s0, 256, %s18, [#allocation3], 128, 128, 8
    $region5: #{tpu_custom_call.1} parent=1 // pred_fallthru
      _
    // Predicated region
    $region6: #{tpu_custom_call.1} parent=1 // pred_check
      _
    $region7: #{tpu_custom_call.1} parent=1 // pred_check_branch
      %25 = sbr.rel (0) target = $region9
    $region8: #{tpu_custom_call.1} parent=1 // pred_region
      %s27 = ssub.s32 1024, 1024
      %28 = vsyncadd [#allocation6], %s27
      %s29 = sshll.u32 [#allocation5], 4
      %s30 = int_to_ptr.vmem [resolvable:$true] %s29
      %35 = dma.hbm_to_vmem [thread:$0]  %s1, 1024, %s30, [#allocation6], 64, 64, 4
    $region9: #{tpu_custom_call.1} parent=1 // pred_fallthru
      _
    // Predicated region
    $region10: #{tpu_custom_call.1} parent=1 // pred_check
      _
    $region11: #{tpu_custom_call.1} parent=1 // pred_check_branch
      %37 = sbr.rel (0) target = $region13
    $region12: #{tpu_custom_call.1} parent=1 // pred_region
      %s39 = ssub.s32 1024, 1024
      %40 = vsyncadd [#allocation6], %s39
      %s41 = sshll.u32 [#allocation7], 4
      %s42 = int_to_ptr.vmem [resolvable:$true] %s41
      %47 = dma.hbm_to_vmem [thread:$0]  %s2, 1024, %s42, [#allocation6], 64, 64, 4
    $region13: #{tpu_custom_call.1} parent=1 // pred_fallthru
      _
    // Predicated region
    $region14: #{tpu_custom_call.1} parent=1 // pred_check
      _
    $region15: #{tpu_custom_call.1} parent=1 // pred_check_branch
      %49 = sbr.rel (0) target = $region17
    $region16: #{tpu_custom_call.1} parent=1 // pred_region
      _
    $region17: #{tpu_custom_call.1} parent=1 // pred_fallthru
      _
    // Predicated region
    $region18: #{tpu_custom_call.1} parent=1 // pred_check
      _
    $region19: #{tpu_custom_call.1} parent=1 // pred_check_branch
      %51 = sbr.rel (0) target = $region21
    $region20: #{tpu_custom_call.1} parent=1 // pred_region
      %52 = dma.done [#allocation3], 256
    $region21: #{tpu_custom_call.1} parent=1 // pred_fallthru
      _
    // Predicated region
    $region22: #{tpu_custom_call.1} parent=1 // pred_check
      _
    $region23: #{tpu_custom_call.1} parent=1 // pred_check_branch
      %54 = sbr.rel (0) target = $region25
    $region24: #{tpu_custom_call.1} parent=1 // pred_region
      %55 = dma.done [#allocation6], 1024
    $region25: #{tpu_custom_call.1} parent=1 // pred_fallthru
      _
    // Predicated region
    $region26: #{tpu_custom_call.1} parent=1 // pred_check
      _
    $region27: #{tpu_custom_call.1} parent=1 // pred_check_branch
      %57 = sbr.rel (0) target = $region29
    $region28: #{tpu_custom_call.1} parent=1 // pred_region
      %58 = dma.done [#allocation6], 1024
    $region29: #{tpu_custom_call.1} parent=1 // pred_fallthru
      _
    %v60 = vld [vmem:[#allocation2] sm:$0xff]
    %v61 = vld [vmem:[#allocation2 + $0x8] sm:$0xff]
    %v62 = vld [vmem:[%s3] sm:$0xf]
    %v63 = vpack.c.bf16 %v61, %v60
    %v64 = vld [vmem:[#allocation5] sm:$0xf]
    %v65 = vld [vmem:[#allocation5 + $0x4] sm:$0xf]
    %v66 = vld [vmem:[#allocation5 + $0x8] sm:$0xf]
    %v67 = vld [vmem:[#allocation5 + $0xc] sm:$0xf]
    %v68 = vld [vmem:[#allocation5 + $0x10] sm:$0xf]
    %v69 = vld [vmem:[#allocation5 + $0x14] sm:$0xf]
    %v70 = vld [vmem:[#allocation5 + $0x18] sm:$0xf]
    %v71 = vld [vmem:[#allocation5 + $0x1c] sm:$0xf]
    %v72 = vld [vmem:[#allocation5 + $0x20] sm:$0xf]
    %v73 = vld [vmem:[#allocation5 + $0x24] sm:$0xf]
    %v74 = vld [vmem:[#allocation5 + $0x28] sm:$0xf]
    %v75 = vld [vmem:[#allocation5 + $0x2c] sm:$0xf]
    %v76 = vld [vmem:[#allocation5 + $0x30] sm:$0xf]
    %v77 = vld [vmem:[#allocation5 + $0x34] sm:$0xf]
    %v78 = vld [vmem:[#allocation5 + $0x38] sm:$0xf]
    %v79 = vld [vmem:[#allocation5 + $0x3c] sm:$0xf]
    %v96 = vunpack.c.l.b16 %v64
    %v97 = vunpack.c.l.b16 %v65
    %v98 = vunpack.c.l.b16 %v66
    %v99 = vunpack.c.l.b16 %v67
    %v100 = vunpack.c.l.b16 %v68
    %v101 = vunpack.c.l.b16 %v69
    %v102 = vunpack.c.l.b16 %v70
    %v103 = vunpack.c.l.b16 %v71
    %v104 = vunpack.c.l.b16 %v72
    %v105 = vunpack.c.l.b16 %v73
    %v106 = vunpack.c.l.b16 %v74
    %v107 = vunpack.c.l.b16 %v75
    %v108 = vunpack.c.l.b16 %v76
    %v109 = vunpack.c.l.b16 %v77
    %v110 = vunpack.c.l.b16 %v78
    %v111 = vunpack.c.l.b16 %v79
    %v112 = vpack.c.b16 %v97, %v96
    %v113 = vpack.c.b16 %v99, %v98
    %v114 = vpack.c.b16 %v101, %v100
    %v115 = vpack.c.b16 %v103, %v102
    %v116 = vpack.c.b16 %v105, %v104
    %v117 = vpack.c.b16 %v107, %v106
    %v118 = vpack.c.b16 %v109, %v108
    %v119 = vpack.c.b16 %v111, %v110
    %128 = vmatprep.subr.bf16.mxu0 0
    %129 = vmatpush1.bf16.msra.mxu0 %v119
    %130 = vmatprep.subr.bf16.mxu0 0
    %131 = vmatpush1.bf16.msra.mxu0 %v118
    %132 = vmatprep.subr.bf16.mxu0 0
    %133 = vmatpush1.bf16.msra.mxu0 %v117
    %134 = vmatprep.subr.bf16.mxu0 0
    %135 = vmatpush1.bf16.msra.mxu0 %v116
    %136 = vmatprep.subr.bf16.mxu0 0
    %137 = vmatpush1.bf16.msra.mxu0 %v115
    %138 = vmatprep.subr.bf16.mxu0 0
    %139 = vmatpush1.bf16.msra.mxu0 %v114
    %140 = vmatprep.subr.bf16.mxu0 0
    %141 = vmatpush1.bf16.msra.mxu0 %v113
    %142 = vmatprep.subr.bf16.mxu0 0
    %143 = vmatpush1.bf16.msra.mxu0 %v112
    %144 = vmatprep.subr.bf16.mxu0 0
    %145 = vmatpush2.bf16.msra.mxu0 0
    %146 = vmatprep.subr.bf16.mxu0 0
    %147 = vmatpush2.bf16.msra.mxu0 0
    %148 = vmatprep.subr.bf16.mxu0 0
    %149 = vmatpush2.bf16.msra.mxu0 0
    %150 = vmatprep.subr.bf16.mxu0 0
    %151 = vmatpush2.bf16.msra.mxu0 0
    %152 = vmatprep.subr.bf16.mxu0 0
    %153 = vmatpush2.bf16.msra.mxu0 0
    %154 = vmatprep.subr.bf16.mxu0 0
    %155 = vmatpush2.bf16.msra.mxu0 0
    %156 = vmatprep.subr.bf16.mxu0 0
    %157 = vmatpush2.bf16.msra.mxu0 0
    %158 = vmatprep.subr.bf16.mxu0 0
    %159 = vmatpush2.bf16.msra.mxu0 0
    %160 = vmatprep.mubr.bf16.mxu0 0
    %161 = vmatmul.mubr.bf16.gmra.mxu0 %v63
    %v162 = vpop.f32.mrf.mxu0
    %v163 = vadd.f32 0.0, %v162
    %v164 = vpop.f32.mrf.mxu0
    %v165 = vpop.f32.mrf.mxu0
    %v166 = vadd.f32 0.0, %v165
    %v167 = vpop.f32.mrf.mxu0
    %168 = vdwg.mxu0
    %v169 = vlaneseq
    %v170 = vshrl.u32 %v169, 7
    %v171 = vsub.s32 0, %v170
    %v172 = vrot.slane %v62, %v171
    %v173 = vmul.f32 %v163, %v172
    %v174 = vmul.f32 %v166, %v172
    %v175 = vlaneseq
    %v176 = vshrl.u32 %v175, 7
    %v177 = vsub.s32 1, %v176
    %v178 = vrot.slane %v62, %v177
    %v179 = vadd.f32 %v173, %v178
    %v180 = vadd.f32 %v174, %v178
    %v181 = vmax.f32 %v179, 0.0
    %v182 = vmax.f32 %v180, 0.0
    %v183 = vpack.c.bf16 %v182, %v181
    %v184 = vld [vmem:[#allocation7] sm:$0xf]
    %v185 = vld [vmem:[#allocation7 + $0x4] sm:$0xf]
    %v186 = vld [vmem:[#allocation7 + $0x8] sm:$0xf]
    %v187 = vld [vmem:[#allocation7 + $0xc] sm:$0xf]
    %v188 = vld [vmem:[#allocation7 + $0x10] sm:$0xf]
    %v189 = vld [vmem:[#allocation7 + $0x14] sm:$0xf]
    %v190 = vld [vmem:[#allocation7 + $0x18] sm:$0xf]
    %v191 = vld [vmem:[#allocation7 + $0x1c] sm:$0xf]
    %v192 = vld [vmem:[#allocation7 + $0x20] sm:$0xf]
    %v193 = vld [vmem:[#allocation7 + $0x24] sm:$0xf]
    %v194 = vld [vmem:[#allocation7 + $0x28] sm:$0xf]
    %v195 = vld [vmem:[#allocation7 + $0x2c] sm:$0xf]
    %v196 = vld [vmem:[#allocation7 + $0x30] sm:$0xf]
    %v197 = vld [vmem:[#allocation7 + $0x34] sm:$0xf]
    %v198 = vld [vmem:[#allocation7 + $0x38] sm:$0xf]
    %v199 = vld [vmem:[#allocation7 + $0x3c] sm:$0xf]
    %v216 = vunpack.c.l.b16 %v184
    %v217 = vunpack.c.l.b16 %v185
    %v218 = vunpack.c.l.b16 %v186
    %v219 = vunpack.c.l.b16 %v187
    %v220 = vunpack.c.l.b16 %v188
    %v221 = vunpack.c.l.b16 %v189
    %v222 = vunpack.c.l.b16 %v190
    %v223 = vunpack.c.l.b16 %v191
    %v224 = vunpack.c.l.b16 %v192
    %v225 = vunpack.c.l.b16 %v193
    %v226 = vunpack.c.l.b16 %v194
    %v227 = vunpack.c.l.b16 %v195
    %v228 = vunpack.c.l.b16 %v196
    %v229 = vunpack.c.l.b16 %v197
    %v230 = vunpack.c.l.b16 %v198
    %v231 = vunpack.c.l.b16 %v199
    %v232 = vpack.c.b16 %v217, %v216
    %v233 = vpack.c.b16 %v219, %v218
    %v234 = vpack.c.b16 %v221, %v220
    %v235 = vpack.c.b16 %v223, %v222
    %v236 = vpack.c.b16 %v225, %v224
    %v237 = vpack.c.b16 %v227, %v226
    %v238 = vpack.c.b16 %v229, %v228
    %v239 = vpack.c.b16 %v231, %v230
    %248 = vmatprep.subr.bf16.mxu0 0
    %249 = vmatpush1.bf16.msra.mxu0 %v239
    %250 = vmatprep.subr.bf16.mxu0 0
    %251 = vmatpush1.bf16.msra.mxu0 %v238
    %252 = vmatprep.subr.bf16.mxu0 0
    %253 = vmatpush1.bf16.msra.mxu0 %v237
    %254 = vmatprep.subr.bf16.mxu0 0
    %255 = vmatpush1.bf16.msra.mxu0 %v236
    %256 = vmatprep.subr.bf16.mxu0 0
    %257 = vmatpush1.bf16.msra.mxu0 %v235
    %258 = vmatprep.subr.bf16.mxu0 0
    %259 = vmatpush1.bf16.msra.mxu0 %v234
    %260 = vmatprep.subr.bf16.mxu0 0
    %261 = vmatpush1.bf16.msra.mxu0 %v233
    %262 = vmatprep.subr.bf16.mxu0 0
    %263 = vmatpush1.bf16.msra.mxu0 %v232
    %264 = vmatprep.subr.bf16.mxu0 0
    %265 = vmatpush2.bf16.msra.mxu0 0
    %266 = vmatprep.subr.bf16.mxu0 0
    %267 = vmatpush2.bf16.msra.mxu0 0
    %268 = vmatprep.subr.bf16.mxu0 0
    %269 = vmatpush2.bf16.msra.mxu0 0
    %270 = vmatprep.subr.bf16.mxu0 0
    %271 = vmatpush2.bf16.msra.mxu0 0
    %272 = vmatprep.subr.bf16.mxu0 0
    %273 = vmatpush2.bf16.msra.mxu0 0
    %274 = vmatprep.subr.bf16.mxu0 0
    %275 = vmatpush2.bf16.msra.mxu0 0
    %276 = vmatprep.subr.bf16.mxu0 0
    %277 = vmatpush2.bf16.msra.mxu0 0
    %278 = vmatprep.subr.bf16.mxu0 0
    %279 = vmatpush2.bf16.msra.mxu0 0
    %280 = vmatprep.mubr.bf16.mxu0 0
    %281 = vmatmul.mubr.bf16.gmra.mxu0 %v183
    %v282 = vpop.f32.mrf.mxu0
    %v283 = vadd.f32 0.0, %v282
    %v284 = vpop.f32.mrf.mxu0
    %v285 = vpop.f32.mrf.mxu0
    %v286 = vadd.f32 0.0, %v285
    %v287 = vpop.f32.mrf.mxu0
    %288 = vdwg.mxu0
    %v289 = vlaneseq
    %v290 = vshrl.u32 %v289, 7
    %v291 = vsub.s32 2, %v290
    %v292 = vrot.slane %v62, %v291
    %v293 = vmul.f32 %v283, %v292
    %v294 = vmul.f32 %v286, %v292
    %v295 = vlaneseq
    %v296 = vshrl.u32 %v295, 7
    %v297 = vsub.s32 3, %v296
    %v298 = vrot.slane %v62, %v297
    %v299 = vadd.f32 %v293, %v298
    %v300 = vadd.f32 %v294, %v298
    %v301 = vmax.f32 %v299, 0.0
    %v302 = vmax.f32 %v300, 0.0
    %v303 = vadd.f32 %v60, %v301
    %v304 = vadd.f32 %v61, %v302
    %305 = vst [vmem:[#allocation8] sm:$0xff] %v303
    %306 = vst [vmem:[#allocation8 + $0x8] sm:$0xff] %v304
    // Predicated region
    $region30: #{tpu_custom_call.1} parent=1 // pred_check
      _
    $region31: #{tpu_custom_call.1} parent=1 // pred_check_branch
      %308 = sbr.rel (0) target = $region33
    $region32: #{tpu_custom_call.1} parent=1 // pred_region
      %s310 = ssub.s32 256, 256
      %311 = vsyncadd [#allocation4], %s310
      %s312 = sshll.u32 [#allocation8], 4
      %s313 = int_to_ptr.vmem [resolvable:$true] %s312
      %318 = dma.vmem_to_hbm [thread:$0]  %s313, 256, %s4, [#allocation4], 128, 128, 8
    $region33: #{tpu_custom_call.1} parent=1 // pred_fallthru
      _
    // Predicated region
    $region34: #{tpu_custom_call.1} parent=1 // pred_check
      _
    $region35: #{tpu_custom_call.1} parent=1 // pred_check_branch
      %320 = sbr.rel (0) target = $region37
    $region36: #{tpu_custom_call.1} parent=1 // pred_region
      %321 = dma.done [#allocation4], 256
    $region37: #{tpu_custom_call.1} parent=1 // pred_fallthru
      _
    %322 = vsyncpa [#allocation3], 1
    %323 = vsyncpa [#allocation6], 1
    %324 = vsyncpa [#allocation4], 1

</llo_original>
